<compile_context>
chip_gen: v6e
topology: v6e:2x2x1
jax: 0.10.0
libtpu: 0.0.40
codegen_flags: <defaults>
</compile_context>

<pallas_src>
import jax
import jax.numpy as jnp
import numpy as np
from jax.experimental import pallas as pl
from jax.experimental.pallas import tpu as pltpu

EPS = 1e-5


def mlp_moons_kernel(
    times_ref,                 # SMEM scalar-prefetch, (1,) int32 (unused in body)
    x_ref,                     # (N, D_PAD)
    w0_ref, b0_ref,            # (D_PAD, H), (1, H)
    w1_ref, b1_ref,            # (H, H),     (1, H)
    w3_ref, b3_ref,            # (H, OUT_PAD), (1, OUT_PAD)
    bn_ref,                    # (1, 4, H): selected-domain [g0, be0, g1, be1]
    o_ref,                     # (N, OUT_PAD)
):
    del times_ref  # domain selection already done by bn_ref's index_map

    x = x_ref[...]
    n = x.shape[0]
    ones_row = jnp.ones((1, n), jnp.float32)   # for MXU-based batch reductions
    inv_n = jnp.float32(1.0 / n)
    bn = bn_ref[0]                             # (4, H)

    def batch_norm(h, g_row, b_row):
        # Batch statistics via MXU: [1,N] @ [N,H] (keeps the XLU off the
        # critical path), then a single fused scale/shift on the VPU.
        s1 = jnp.dot(ones_row, h, preferred_element_type=jnp.float32)       # sum
        s2 = jnp.dot(ones_row, h * h, preferred_element_type=jnp.float32)   # sumsq
        mean = s1 * inv_n
        var = s2 * inv_n - mean * mean
        scale = jax.lax.rsqrt(var + EPS) * g_row          # rsqrt -> EUP (free slot)
        shift = b_row - mean * scale
        return h * scale + shift

    # layer_0 -> relu -> bn0
    h = jnp.dot(x, w0_ref[...], preferred_element_type=jnp.float32) + b0_ref[...]
    h = jnp.maximum(h, 0.0)
    h = batch_norm(h, bn[0:1, :], bn[1:2, :])

    # layer_1 -> relu -> bn1
    h = jnp.dot(h, w1_ref[...], preferred_element_type=jnp.float32) + b1_ref[...]
    h = jnp.maximum(h, 0.0)
    h = batch_norm(h, bn[2:3, :], bn[3:4, :])

    # layer_3 (logits, lane-dense padded output)
    o_ref[...] = (
        jnp.dot(h, w3_ref[...], preferred_element_type=jnp.float32) + b3_ref[...]
    ).astype(o_ref.dtype)


def mlp_moons_forward(x, times_idx, params):
    """x: [N, data_shape] f32; times_idx: scalar int domain index."""
    n, d_in = x.shape
    hidden = params["w0"].shape[1]
    out_dim = params["w3"].shape[1]
    domains = params["g0"].shape[0]

    # --- wrapper-side layout plumbing (zero-padding does not change results) ---
    d_pad = max(8, ((d_in + 7) // 8) * 8)              # sublane-align w0 / x features
    out_pad = ((out_dim + 127) // 128) * 128           # lane-dense output slab

    f32 = jnp.float32
    x_pad = jnp.zeros((n, d_pad), f32).at[:, :d_in].set(x)
    w0_pad = jnp.zeros((d_pad, hidden), f32).at[:d_in, :].set(params["w0"])
    w3_pad = jnp.zeros((hidden, out_pad), f32).at[:, :out_dim].set(params["w3"])
    b3_pad = jnp.zeros((1, out_pad), f32).at[:, :out_dim].set(params["b3"])

    # Pack per-domain BN params as (domains, 4, hidden): [g0, be0, g1, be1].
    bn_packed = jnp.stack(
        [params["g0"], params["be0"], params["g1"], params["be1"]], axis=1
    ).astype(f32)

    # Clip the domain index (no runtime OOB check on TPU DMAs / VMEM).
    times = jnp.clip(
        jnp.asarray(times_idx, jnp.int32), 0, domains - 1
    ).reshape((1,))

    def full2d(shape):
        return pl.BlockSpec(shape, lambda i, t: (0, 0))

    bn_spec = pl.BlockSpec((1, 4, hidden), lambda i, t: (t[0], 0, 0))

    grid_spec = pltpu.PrefetchScalarGridSpec(
        num_scalar_prefetch=1,
        grid=(1,),
        in_specs=[
            full2d((n, d_pad)),            # x
            full2d((d_pad, hidden)),       # w0
            full2d((1, hidden)),           # b0
            full2d((hidden, hidden)),      # w1
            full2d((1, hidden)),           # b1
            full2d((hidden, out_pad)),     # w3 (padded)
            full2d((1, out_pad)),          # b3 (padded)
            bn_spec,                       # packed per-domain gamma/beta
        ],
        out_specs=pl.BlockSpec((n, out_pad), lambda i, t: (0, 0)),
    )

    flops = (
        2 * n * (d_pad * hidden + hidden * hidden + hidden * out_pad)  # 3 matmuls
        + 4 * 2 * n * hidden                                           # BN stat matmuls
        + 8 * n * hidden                                               # BN/ReLU epilogue
    )
    bytes_accessed = 4 * (
        n * d_pad + d_pad * hidden + hidden + hidden * hidden + hidden
        + hidden * out_pad + out_pad + 4 * hidden + n * out_pad
    )
    cost = pl.CostEstimate(
        flops=flops, transcendentals=2 * hidden, bytes_accessed=bytes_accessed
    )

    out = pl.pallas_call(
        mlp_moons_kernel,
        out_shape=jax.ShapeDtypeStruct((n, out_pad), jnp.float32),
        grid_spec=grid_spec,
        compiler_params=pltpu.CompilerParams(
            dimension_semantics=("arbitrary",)
        ),
        cost_estimate=cost,
    )(times, x_pad, w0_pad, params["b0"], params["w1"], params["b1"],
      w3_pad, b3_pad, bn_packed)

    return out[:, :out_dim]


def init_params(key, data_shape=3, hidden_shape=128, out_shape=2, domains=3):
    """Matches the PyTorch module's __init__: kaiming_normal_ weights
    (std = sqrt(2 / fan_in)), zero biases, GraphBN gamma=1 / beta=0 per
    domain.  (layer_2/bn2 exist in the module but are unused in forward.)"""
    ks = jax.random.split(key, 3)

    def kaiming(k, fan_in, fan_out):
        std = np.sqrt(2.0 / fan_in)
        # stored pre-transposed as [in, out] (PyTorch stores [out, in])
        return jax.random.normal(k, (fan_in, fan_out), jnp.float32) * std

    p = {}
    p["w0"] = kaiming(ks[0], data_shape, hidden_shape)
    p["b0"] = jnp.zeros((1, hidden_shape), jnp.float32)
    p["w1"] = kaiming(ks[1], hidden_shape, hidden_shape)
    p["b1"] = jnp.zeros((1, hidden_shape), jnp.float32)
    p["w3"] = kaiming(ks[2], hidden_shape, out_shape)
    p["b3"] = jnp.zeros((1, out_shape), jnp.float32)
    for i in range(2):
        p[f"g{i}"] = jnp.ones((domains, hidden_shape), jnp.float32)
        p[f"be{i}"] = jnp.zeros((domains, hidden_shape), jnp.float32)
    return p


def reference_forward(x, times_idx, params):
    """Pure-JAX reference (same semantics as the PyTorch forward with the
    GraphBN-as-per-domain-batchnorm model)."""
    def bn(h, g, b):
        m = jnp.mean(h, axis=0, keepdims=True)
        v = jnp.mean((h - m) ** 2, axis=0, keepdims=True)
        return (h - m) / jnp.sqrt(v + EPS) * g[times_idx] + b[times_idx]

    h = jnp.maximum(x @ params["w0"] + params["b0"], 0.0)
    h = bn(h, params["g0"], params["be0"])
    h = jnp.maximum(h @ params["w1"] + params["b1"], 0.0)
    h = bn(h, params["g1"], params["be1"])
    return h @ params["w3"] + params["b3"]


if __name__ == "__main__":
    key = jax.random.PRNGKey(0)
    k_param, k_x = jax.random.split(key)

    N, DATA, HIDDEN, OUT, DOMAINS = 8, 3, 128, 2, 3
    params = init_params(k_param, DATA, HIDDEN, OUT, DOMAINS)
    x = jax.random.normal(k_x, (N, DATA), jnp.float32)
    times_idx = 1  # domain index

    out = mlp_moons_forward(x, times_idx, params)
    out = jax.block_until_ready(out)

    ref = jax.block_until_ready(reference_forward(x, times_idx, params))
    assert out.shape == (N, OUT)
    np.testing.assert_allclose(np.asarray(out), np.asarray(ref), rtol=1e-4, atol=1e-4)

    print("KERNEL_OK")
</pallas_src>

<mosaic_0001>
module attributes {stable_mosaic.version = 11 : i64} {
  func.func @mlp_moons_kernel(%arg0: i32, %arg1: memref<1xi32, #tpu.memory_space<smem>>, %arg2: memref<8x8xf32, #tpu.memory_space<vmem>>, %arg3: memref<8x128xf32, #tpu.memory_space<vmem>>, %arg4: memref<1x128xf32, #tpu.memory_space<vmem>>, %arg5: memref<128x128xf32, #tpu.memory_space<vmem>>, %arg6: memref<1x128xf32, #tpu.memory_space<vmem>>, %arg7: memref<128x128xf32, #tpu.memory_space<vmem>>, %arg8: memref<1x128xf32, #tpu.memory_space<vmem>>, %arg9: memref<1x4x128xf32, #tpu.memory_space<vmem>>, %arg10: memref<8x128xf32, #tpu.memory_space<vmem>>) attributes {dimension_semantics = [#tpu.dimension_semantics<arbitrary>], iteration_bounds = array<i64: 1>, scalar_prefetch = 1 : i64, scratch_operands = 0 : i64, tpu.core_type = #tpu.core_type<tc>, window_params = [{pipeline_mode = #tpu.pipeline_mode<synchronous>, transform_indices = @transform_0, window_bounds = array<i64: 8, 8>}, {pipeline_mode = #tpu.pipeline_mode<synchronous>, transform_indices = @transform_1, window_bounds = array<i64: 8, 128>}, {pipeline_mode = #tpu.pipeline_mode<synchronous>, transform_indices = @transform_2, window_bounds = array<i64: 1, 128>}, {pipeline_mode = #tpu.pipeline_mode<synchronous>, transform_indices = @transform_3, window_bounds = array<i64: 128, 128>}, {pipeline_mode = #tpu.pipeline_mode<synchronous>, transform_indices = @transform_4, window_bounds = array<i64: 1, 128>}, {pipeline_mode = #tpu.pipeline_mode<synchronous>, transform_indices = @transform_5, window_bounds = array<i64: 128, 128>}, {pipeline_mode = #tpu.pipeline_mode<synchronous>, transform_indices = @transform_6, window_bounds = array<i64: 1, 128>}, {transform_indices = @transform_7, window_bounds = array<i64: 1, 4, 128>}, {pipeline_mode = #tpu.pipeline_mode<synchronous>, transform_indices = @transform_8, window_bounds = array<i64: 8, 128>}]} {
    %c0 = arith.constant 0 : index
    %c0_0 = arith.constant 0 : index
    %0 = vector.load %arg2[%c0, %c0_0] : memref<8x8xf32, #tpu.memory_space<vmem>>, vector<8x8xf32>
    %cst = arith.constant 1.000000e+00 : f32
    %1 = vector.broadcast %cst : f32 to vector<1x8xf32>
    %c0_1 = arith.constant 0 : index
    %c0_2 = arith.constant 0 : index
    %c0_3 = arith.constant 0 : index
    %2 = vector.load %arg9[%c0_1, %c0_2, %c0_3] : memref<1x4x128xf32, #tpu.memory_space<vmem>>, vector<1x4x128xf32>
    %3 = vector.shape_cast %2 : vector<1x4x128xf32> to vector<4x128xf32>
    %c0_4 = arith.constant 0 : index
    %c0_5 = arith.constant 0 : index
    %4 = vector.load %arg3[%c0_4, %c0_5] : memref<8x128xf32, #tpu.memory_space<vmem>>, vector<8x128xf32>
    %cst_6 = arith.constant dense<0.000000e+00> : vector<8x128xf32>
    %5 = tpu.matmul %0, %4, %cst_6 {dimension_numbers = #tpu.dot_dimension_numbers<[1], [0], [0], [1], [0, 0, 1, 1], [], []>} : vector<8x8xf32>, vector<8x128xf32>, vector<8x128xf32> -> vector<8x128xf32>
    %c0_7 = arith.constant 0 : index
    %c0_8 = arith.constant 0 : index
    %6 = vector.load %arg4[%c0_7, %c0_8] : memref<1x128xf32, #tpu.memory_space<vmem>>, vector<1x128xf32>
    %7 = vector.broadcast %6 : vector<1x128xf32> to vector<8x128xf32>
    %8 = arith.addf %5, %7 : vector<8x128xf32>
    %cst_9 = arith.constant 0.000000e+00 : f32
    %9 = vector.broadcast %cst_9 : f32 to vector<8x128xf32>
    %10 = arith.maximumf %8, %9 : vector<8x128xf32>
    %11 = vector.extract_strided_slice %3 {offsets = [0, 0], sizes = [1, 128], strides = [1, 1]} : vector<4x128xf32> to vector<1x128xf32>
    %12 = vector.extract_strided_slice %3 {offsets = [1, 0], sizes = [1, 128], strides = [1, 1]} : vector<4x128xf32> to vector<1x128xf32>
    %cst_10 = arith.constant dense<0.000000e+00> : vector<1x128xf32>
    %13 = tpu.matmul %1, %10, %cst_10 {dimension_numbers = #tpu.dot_dimension_numbers<[1], [0], [0], [1], [0, 0, 1, 1], [], []>} : vector<1x8xf32>, vector<8x128xf32>, vector<1x128xf32> -> vector<1x128xf32>
    %14 = arith.mulf %10, %10 : vector<8x128xf32>
    %cst_11 = arith.constant dense<0.000000e+00> : vector<1x128xf32>
    %15 = tpu.matmul %1, %14, %cst_11 {dimension_numbers = #tpu.dot_dimension_numbers<[1], [0], [0], [1], [0, 0, 1, 1], [], []>} : vector<1x8xf32>, vector<8x128xf32>, vector<1x128xf32> -> vector<1x128xf32>
    %cst_12 = arith.constant 1.250000e-01 : f32
    %16 = vector.broadcast %cst_12 : f32 to vector<1x128xf32>
    %17 = arith.mulf %13, %16 : vector<1x128xf32>
    %cst_13 = arith.constant 1.250000e-01 : f32
    %18 = vector.broadcast %cst_13 : f32 to vector<1x128xf32>
    %19 = arith.mulf %15, %18 : vector<1x128xf32>
    %20 = arith.mulf %17, %17 : vector<1x128xf32>
    %21 = arith.subf %19, %20 : vector<1x128xf32>
    %cst_14 = arith.constant 9.99999974E-6 : f32
    %22 = vector.broadcast %cst_14 : f32 to vector<1x128xf32>
    %23 = arith.addf %21, %22 : vector<1x128xf32>
    %24 = math.rsqrt %23 : vector<1x128xf32>
    %25 = arith.mulf %24, %11 : vector<1x128xf32>
    %26 = arith.mulf %17, %25 : vector<1x128xf32>
    %27 = arith.subf %12, %26 : vector<1x128xf32>
    %28 = vector.broadcast %25 : vector<1x128xf32> to vector<8x128xf32>
    %29 = arith.mulf %10, %28 : vector<8x128xf32>
    %30 = vector.broadcast %27 : vector<1x128xf32> to vector<8x128xf32>
    %31 = arith.addf %29, %30 : vector<8x128xf32>
    %c0_15 = arith.constant 0 : index
    %c0_16 = arith.constant 0 : index
    %32 = vector.load %arg5[%c0_15, %c0_16] : memref<128x128xf32, #tpu.memory_space<vmem>>, vector<128x128xf32>
    %cst_17 = arith.constant dense<0.000000e+00> : vector<8x128xf32>
    %33 = tpu.matmul %31, %32, %cst_17 {dimension_numbers = #tpu.dot_dimension_numbers<[1], [0], [0], [1], [0, 0, 1, 1], [], []>} : vector<8x128xf32>, vector<128x128xf32>, vector<8x128xf32> -> vector<8x128xf32>
    %c0_18 = arith.constant 0 : index
    %c0_19 = arith.constant 0 : index
    %34 = vector.load %arg6[%c0_18, %c0_19] : memref<1x128xf32, #tpu.memory_space<vmem>>, vector<1x128xf32>
    %35 = vector.broadcast %34 : vector<1x128xf32> to vector<8x128xf32>
    %36 = arith.addf %33, %35 : vector<8x128xf32>
    %cst_20 = arith.constant 0.000000e+00 : f32
    %37 = vector.broadcast %cst_20 : f32 to vector<8x128xf32>
    %38 = arith.maximumf %36, %37 : vector<8x128xf32>
    %39 = vector.extract_strided_slice %3 {offsets = [2, 0], sizes = [1, 128], strides = [1, 1]} : vector<4x128xf32> to vector<1x128xf32>
    %40 = vector.extract_strided_slice %3 {offsets = [3, 0], sizes = [1, 128], strides = [1, 1]} : vector<4x128xf32> to vector<1x128xf32>
    %cst_21 = arith.constant dense<0.000000e+00> : vector<1x128xf32>
    %41 = tpu.matmul %1, %38, %cst_21 {dimension_numbers = #tpu.dot_dimension_numbers<[1], [0], [0], [1], [0, 0, 1, 1], [], []>} : vector<1x8xf32>, vector<8x128xf32>, vector<1x128xf32> -> vector<1x128xf32>
    %42 = arith.mulf %38, %38 : vector<8x128xf32>
    %cst_22 = arith.constant dense<0.000000e+00> : vector<1x128xf32>
    %43 = tpu.matmul %1, %42, %cst_22 {dimension_numbers = #tpu.dot_dimension_numbers<[1], [0], [0], [1], [0, 0, 1, 1], [], []>} : vector<1x8xf32>, vector<8x128xf32>, vector<1x128xf32> -> vector<1x128xf32>
    %cst_23 = arith.constant 1.250000e-01 : f32
    %44 = vector.broadcast %cst_23 : f32 to vector<1x128xf32>
    %45 = arith.mulf %41, %44 : vector<1x128xf32>
    %cst_24 = arith.constant 1.250000e-01 : f32
    %46 = vector.broadcast %cst_24 : f32 to vector<1x128xf32>
    %47 = arith.mulf %43, %46 : vector<1x128xf32>
    %48 = arith.mulf %45, %45 : vector<1x128xf32>
    %49 = arith.subf %47, %48 : vector<1x128xf32>
    %cst_25 = arith.constant 9.99999974E-6 : f32
    %50 = vector.broadcast %cst_25 : f32 to vector<1x128xf32>
    %51 = arith.addf %49, %50 : vector<1x128xf32>
    %52 = math.rsqrt %51 : vector<1x128xf32>
    %53 = arith.mulf %52, %39 : vector<1x128xf32>
    %54 = arith.mulf %45, %53 : vector<1x128xf32>
    %55 = arith.subf %40, %54 : vector<1x128xf32>
    %56 = vector.broadcast %53 : vector<1x128xf32> to vector<8x128xf32>
    %57 = arith.mulf %38, %56 : vector<8x128xf32>
    %58 = vector.broadcast %55 : vector<1x128xf32> to vector<8x128xf32>
    %59 = arith.addf %57, %58 : vector<8x128xf32>
    %c0_26 = arith.constant 0 : index
    %c0_27 = arith.constant 0 : index
    %60 = vector.load %arg7[%c0_26, %c0_27] : memref<128x128xf32, #tpu.memory_space<vmem>>, vector<128x128xf32>
    %cst_28 = arith.constant dense<0.000000e+00> : vector<8x128xf32>
    %61 = tpu.matmul %59, %60, %cst_28 {dimension_numbers = #tpu.dot_dimension_numbers<[1], [0], [0], [1], [0, 0, 1, 1], [], []>} : vector<8x128xf32>, vector<128x128xf32>, vector<8x128xf32> -> vector<8x128xf32>
    %c0_29 = arith.constant 0 : index
    %c0_30 = arith.constant 0 : index
    %62 = vector.load %arg8[%c0_29, %c0_30] : memref<1x128xf32, #tpu.memory_space<vmem>>, vector<1x128xf32>
    %63 = vector.broadcast %62 : vector<1x128xf32> to vector<8x128xf32>
    %64 = arith.addf %61, %63 : vector<8x128xf32>
    %c0_31 = arith.constant 0 : index
    %c0_32 = arith.constant 0 : index
    %65 = vector.load %arg10[%c0_31, %c0_32] : memref<8x128xf32, #tpu.memory_space<vmem>>, vector<8x128xf32>
    tpu.vector_store %arg10[%c0_31, %c0_32], %64 {strides = array<i32>} : memref<8x128xf32, #tpu.memory_space<vmem>>, vector<8x128xf32>,
    return
  }
  func.func @transform_0(%arg0: i32, %arg1: memref<1xi32, #tpu.memory_space<smem>>) -> (i32, i32) {
    %c0_i32 = arith.constant 0 : i32
    %c0_i32_0 = arith.constant 0 : i32
    %c0_i32_1 = arith.constant 0 : i32
    return %c0_i32, %c0_i32_0 : i32, i32
  }
  func.func @transform_1(%arg0: i32, %arg1: memref<1xi32, #tpu.memory_space<smem>>) -> (i32, i32) {
    %c0_i32 = arith.constant 0 : i32
    %c0_i32_0 = arith.constant 0 : i32
    %c0_i32_1 = arith.constant 0 : i32
    return %c0_i32, %c0_i32_0 : i32, i32
  }
  func.func @transform_2(%arg0: i32, %arg1: memref<1xi32, #tpu.memory_space<smem>>) -> (i32, i32) {
    %c0_i32 = arith.constant 0 : i32
    %c0_i32_0 = arith.constant 0 : i32
    %c0_i32_1 = arith.constant 0 : i32
    return %c0_i32, %c0_i32_0 : i32, i32
  }
  func.func @transform_3(%arg0: i32, %arg1: memref<1xi32, #tpu.memory_space<smem>>) -> (i32, i32) {
    %c0_i32 = arith.constant 0 : i32
    %c0_i32_0 = arith.constant 0 : i32
    %c0_i32_1 = arith.constant 0 : i32
    return %c0_i32, %c0_i32_0 : i32, i32
  }
  func.func @transform_4(%arg0: i32, %arg1: memref<1xi32, #tpu.memory_space<smem>>) -> (i32, i32) {
    %c0_i32 = arith.constant 0 : i32
    %c0_i32_0 = arith.constant 0 : i32
    %c0_i32_1 = arith.constant 0 : i32
    return %c0_i32, %c0_i32_0 : i32, i32
  }
  func.func @transform_5(%arg0: i32, %arg1: memref<1xi32, #tpu.memory_space<smem>>) -> (i32, i32) {
    %c0_i32 = arith.constant 0 : i32
    %c0_i32_0 = arith.constant 0 : i32
    %c0_i32_1 = arith.constant 0 : i32
    return %c0_i32, %c0_i32_0 : i32, i32
  }
  func.func @transform_6(%arg0: i32, %arg1: memref<1xi32, #tpu.memory_space<smem>>) -> (i32, i32) {
    %c0_i32 = arith.constant 0 : i32
    %c0_i32_0 = arith.constant 0 : i32
    %c0_i32_1 = arith.constant 0 : i32
    return %c0_i32, %c0_i32_0 : i32, i32
  }
  func.func @transform_7(%arg0: i32, %arg1: memref<1xi32, #tpu.memory_space<smem>>) -> (i32, i32, i32) {
    %c0 = arith.constant 0 : index
    %0 = memref.load %arg1[%c0] : memref<1xi32, #tpu.memory_space<smem>>
    %c0_i32 = arith.constant 0 : i32
    %c0_i32_0 = arith.constant 0 : i32
    %c0_i32_1 = arith.constant 0 : i32
    return %0, %c0_i32, %c0_i32_0 : i32, i32, i32
  }
  func.func @transform_8(%arg0: i32, %arg1: memref<1xi32, #tpu.memory_space<smem>>) -> (i32, i32) {
    %c0_i32 = arith.constant 0 : i32
    %c0_i32_0 = arith.constant 0 : i32
    %c0_i32_1 = arith.constant 0 : i32
    return %c0_i32, %c0_i32_0 : i32, i32
  }
}

</mosaic_0001>

<llo_original>
// kernel: tpu_custom_call.1
$region0: #{tpu_custom_call.1}
  #allocation0 [shape = 'u32[]', space=smem, size = 0x4, offset = 0x4, fixed_abs, tag = 'smem constant byte address 0x4 - core index']
  #allocation1 [shape = 'u32[144,128]{1,0:T(1,128)}', space=vmem, size = 0x12000, scoped, tag = 'internal scratch']
  #allocation2 [shape = 's32[1]{0}', space=sflag, size = 0x4, scoped, tag = 'scoped memory for tpu_custom_call.1']
  #allocation3 [shape = 's32[1]{0:T(128)S(6)}', space=smem, size = 0x200, scoped, tag = 'prefetched SMEM operand 0']
  %s0 = inlined_call_operand.<no memory space> [shape: s32[1], index: 0, kind: input, shape index: {}]
  %s1 = inlined_call_operand.hbm [shape: f32[8,8], index: 1, kind: input, shape index: {}]
  %s2 = inlined_call_operand.hbm [shape: f32[8,128], index: 2, kind: input, shape index: {}]
  %s3 = inlined_call_operand.vmem [shape: f32[1,128], index: 3, kind: input, shape index: {}]
  %s4 = inlined_call_operand.hbm [shape: f32[128,128], index: 4, kind: input, shape index: {}]
  %s5 = inlined_call_operand.vmem [shape: f32[1,128], index: 5, kind: input, shape index: {}]
  %s6 = inlined_call_operand.hbm [shape: f32[128,128], index: 6, kind: input, shape index: {}]
  %s7 = inlined_call_operand.hbm [shape: f32[1,128], index: 7, kind: input, shape index: {}]
  %s8 = inlined_call_operand.vmem [shape: f32[3,4,128], index: 8, kind: input, shape index: {}]
  %s9 = inlined_call_operand.hbm [shape: f32[8,128], index: 9, kind: output, shape index: {}]
  %s10 = sld [smem:[#allocation0]]
  $region62: #{tpu_custom_call.1} parent=0
    _
  %s12 = ssub.s32 1, %s10
  %s13 = scalar_select 0, %s12, %s10
  %14 = sst [smem:[#allocation3]] %s0
  $region1: #{tpu_custom_call.1} parent=0
    #allocation4 [shape = 'u8[4096]{0}', space=vmem, size = 0x1000, scoped, tag = 'input window, operand 1, single buffered']
    #allocation5 [shape = 's32[1]{0}', space=sflag, size = 0x4, scoped, tag = 'scoped memory for tpu_custom_call.1']
    #allocation6 [shape = 's32[1]{0}', space=sflag, size = 0x4, scoped, tag = 'scoped memory for tpu_custom_call.1']
    #allocation7 [shape = 'u8[4096]{0}', space=vmem, size = 0x1000, scoped, tag = 'input window, operand 2, single buffered']
    #allocation8 [shape = 's32[1]{0}', space=sflag, size = 0x4, scoped, tag = 'scoped memory for tpu_custom_call.1']
    #allocation9 [shape = 'u8[65536]{0}', space=vmem, size = 0x10000, scoped, tag = 'input window, operand 4, single buffered']
    #allocation10 [shape = 'u8[65536]{0}', space=vmem, size = 0x10000, scoped, tag = 'input window, operand 6, single buffered']
    #allocation11 [shape = 's32[1]{0}', space=sflag, size = 0x4, scoped, tag = 'scoped memory for tpu_custom_call.1']
    #allocation12 [shape = 'u8[512]{0}', space=vmem, size = 0x400, scoped, tag = 'input window, operand 7, single buffered']
    #allocation13 [shape = 'u8[4096]{0}', space=vmem, size = 0x1000, scoped, tag = 'output window, operand 0, single buffered']
    %15 = vsyncpa [#allocation5], 0
    %16 = vsyncpa [#allocation8], 0
    %17 = vsyncpa [#allocation11], 0
    %18 = vsyncpa [#allocation6], 0
    // Predicated region
    $region2: #{tpu_custom_call.1} parent=1 // pred_check
      _
    $region3: #{tpu_custom_call.1} parent=1 // pred_check_branch
      %20 = sbr.rel (0) target = $region5
    $region4: #{tpu_custom_call.1} parent=1 // pred_region
      %s22 = ssub.s32 128, 128
      %23 = vsyncadd [#allocation5], %s22
      %s25 = sshll.u32 [#allocation4], 4
      %s26 = int_to_ptr.vmem [resolvable:$true] %s25
      %28 = dma.hbm_to_vmem [thread:$0]  %s1, 128, %s26, [#allocation5]
    $region5: #{tpu_custom_call.1} parent=1 // pred_fallthru
      _
    // Predicated region
    $region6: #{tpu_custom_call.1} parent=1 // pred_check
      _
    $region7: #{tpu_custom_call.1} parent=1 // pred_check_branch
      %30 = sbr.rel (0) target = $region9
    $region8: #{tpu_custom_call.1} parent=1 // pred_region
      %s32 = ssub.s32 128, 128
      %33 = vsyncadd [#allocation8], %s32
      %s35 = sshll.u32 [#allocation7], 4
      %s36 = int_to_ptr.vmem [resolvable:$true] %s35
      %38 = dma.hbm_to_vmem [thread:$0]  %s2, 128, %s36, [#allocation8]
    $region9: #{tpu_custom_call.1} parent=1 // pred_fallthru
      _
    // Predicated region
    $region10: #{tpu_custom_call.1} parent=1 // pred_check
      _
    $region11: #{tpu_custom_call.1} parent=1 // pred_check_branch
      %40 = sbr.rel (0) target = $region13
    $region12: #{tpu_custom_call.1} parent=1 // pred_region
      _
    $region13: #{tpu_custom_call.1} parent=1 // pred_fallthru
      _
    // Predicated region
    $region14: #{tpu_custom_call.1} parent=1 // pred_check
      _
    $region15: #{tpu_custom_call.1} parent=1 // pred_check_branch
      %42 = sbr.rel (0) target = $region17
    $region16: #{tpu_custom_call.1} parent=1 // pred_region
      %s44 = ssub.s32 2048, 2048
      %45 = vsyncadd [#allocation8], %s44
      %s46 = sshll.u32 [#allocation9], 4
      %s47 = int_to_ptr.vmem [resolvable:$true] %s46
      %52 = dma.hbm_to_vmem [thread:$0]  %s4, 2048, %s47, [#allocation8], 128, 128, 8
    $region17: #{tpu_custom_call.1} parent=1 // pred_fallthru
      _
    // Predicated region
    $region18: #{tpu_custom_call.1} parent=1 // pred_check
      _
    $region19: #{tpu_custom_call.1} parent=1 // pred_check_branch
      %54 = sbr.rel (0) target = $region21
    $region20: #{tpu_custom_call.1} parent=1 // pred_region
      _
    $region21: #{tpu_custom_call.1} parent=1 // pred_fallthru
      _
    // Predicated region
    $region22: #{tpu_custom_call.1} parent=1 // pred_check
      _
    $region23: #{tpu_custom_call.1} parent=1 // pred_check_branch
      %56 = sbr.rel (0) target = $region25
    $region24: #{tpu_custom_call.1} parent=1 // pred_region
      %s58 = ssub.s32 2048, 2048
      %59 = vsyncadd [#allocation11], %s58
      %s60 = sshll.u32 [#allocation10], 4
      %s61 = int_to_ptr.vmem [resolvable:$true] %s60
      %66 = dma.hbm_to_vmem [thread:$0]  %s6, 2048, %s61, [#allocation11], 128, 128, 8
    $region25: #{tpu_custom_call.1} parent=1 // pred_fallthru
      _
    // Predicated region
    $region26: #{tpu_custom_call.1} parent=1 // pred_check
      _
    $region27: #{tpu_custom_call.1} parent=1 // pred_check_branch
      %68 = sbr.rel (0) target = $region29
    $region28: #{tpu_custom_call.1} parent=1 // pred_region
      %s70 = ssub.s32 16, 16
      %71 = vsyncadd [#allocation11], %s70
      %s73 = sshll.u32 [#allocation12], 4
      %s74 = int_to_ptr.vmem [resolvable:$true] %s73
      %76 = dma.hbm_to_vmem [thread:$0]  %s7, 16, %s74, [#allocation11]
    $region29: #{tpu_custom_call.1} parent=1 // pred_fallthru
      _
    // Predicated region
    $region30: #{tpu_custom_call.1} parent=1 // pred_check
      _
    $region31: #{tpu_custom_call.1} parent=1 // pred_check_branch
      %78 = sbr.rel (0) target = $region33
    $region32: #{tpu_custom_call.1} parent=1 // pred_region
      %s79 = sld [smem:[#allocation3]]
      %p80 = scmp.lt.s32.totalorder %s79, 2
      %s81 = scalar_select %p80, %s79, 2
      %s82 = smul.addr %s81, 4
      %s83 = scalar_lea.vmem %s8, %s82
      %s84 = sld [smem:[#allocation3]]
    $region33: #{tpu_custom_call.1} parent=1 // pred_fallthru
      _
    // Predicated region
    $region34: #{tpu_custom_call.1} parent=1 // pred_check
      _
    $region35: #{tpu_custom_call.1} parent=1 // pred_check_branch
      %86 = sbr.rel (0) target = $region37
    $region36: #{tpu_custom_call.1} parent=1 // pred_region
      %87 = dma.done [#allocation5], 128
    $region37: #{tpu_custom_call.1} parent=1 // pred_fallthru
      _
    // Predicated region
    $region38: #{tpu_custom_call.1} parent=1 // pred_check
      _
    $region39: #{tpu_custom_call.1} parent=1 // pred_check_branch
      %89 = sbr.rel (0) target = $region41
    $region40: #{tpu_custom_call.1} parent=1 // pred_region
      %90 = dma.done [#allocation8], 128
    $region41: #{tpu_custom_call.1} parent=1 // pred_fallthru
      _
    // Predicated region
    $region42: #{tpu_custom_call.1} parent=1 // pred_check
      _
    $region43: #{tpu_custom_call.1} parent=1 // pred_check_branch
      %92 = sbr.rel (0) target = $region45
    $region44: #{tpu_custom_call.1} parent=1 // pred_region
      %93 = dma.done [#allocation8], 2048
    $region45: #{tpu_custom_call.1} parent=1 // pred_fallthru
      _
    // Predicated region
    $region46: #{tpu_custom_call.1} parent=1 // pred_check
      _
    $region47: #{tpu_custom_call.1} parent=1 // pred_check_branch
      %95 = sbr.rel (0) target = $region49
    $region48: #{tpu_custom_call.1} parent=1 // pred_region
      %96 = dma.done [#allocation11], 2048
    $region49: #{tpu_custom_call.1} parent=1 // pred_fallthru
      _
    // Predicated region
    $region50: #{tpu_custom_call.1} parent=1 // pred_check
      _
    $region51: #{tpu_custom_call.1} parent=1 // pred_check_branch
      %98 = sbr.rel (0) target = $region53
    $region52: #{tpu_custom_call.1} parent=1 // pred_region
      %99 = dma.done [#allocation11], 16
    $region53: #{tpu_custom_call.1} parent=1 // pred_fallthru
      _
    %s100 = sld [smem:[#allocation3]]
    %p101 = scmp.lt.s32.totalorder %s100, 2
    %s102 = scalar_select %p101, %s100, 2
    %s103 = smul.addr %s102, 4
    %s104 = scalar_lea.vmem %s8, %s103
    %s105 = sld [smem:[#allocation3]]
    %p106 = scmp.lt.s32.totalorder %s105, 2
    %s107 = scalar_select %p106, %s105, 2
    %s108 = smul.addr %s107, 4
    %s109 = scalar_lea.vmem %s8, %s108
    %s110 = sld [smem:[#allocation3]]
    %v111 = vld [vmem:[#allocation4] sm:$0xff]
    %v112 = vld [vmem:[%s109] sm:$0xf]
    %v113 = vld [vmem:[#allocation7] sm:$0xff]
    %v114 = vld [vmem:[%s3] sm:$0x1]
    %v116 = vlaneseq
    %v117 = vshrl.u32 %v116, 7
    %v118 = vsub.s32 0, %v117
    %v119 = vrot.slane %v114, %v118
    %vm121 = vcmask 64512
    %v123 = vsel %vm121, %v111, 0
    %125 = vmatprep.subr.mxu0 0.0
    %126 = vmatpush1.msra.mxu0 0.0
    %127 = vmatprep.subr.mxu0 0.0
    %128 = vmatpush1.msra.mxu0 0.0
    %129 = vmatprep.subr.mxu0 0.0
    %130 = vmatpush1.msra.mxu0 0.0
    %131 = vmatprep.subr.mxu0 0.0
    %132 = vmatpush1.msra.mxu0 0.0
    %133 = vmatprep.subr.mxu0 0.0
    %134 = vmatpush1.msra.mxu0 0.0
    %135 = vmatprep.subr.mxu0 0.0
    %136 = vmatpush1.msra.mxu0 0.0
    %137 = vmatprep.subr.mxu0 0.0
    %138 = vmatpush1.msra.mxu0 0.0
    %139 = vmatprep.subr.mxu0 0.0
    %140 = vmatpush1.msra.mxu0 0.0
    %141 = vmatprep.subr.mxu0 0.0
    %142 = vmatpush1.msra.mxu0 0.0
    %143 = vmatprep.subr.mxu0 0.0
    %144 = vmatpush1.msra.mxu0 0.0
    %145 = vmatprep.subr.mxu0 0.0
    %146 = vmatpush1.msra.mxu0 0.0
    %147 = vmatprep.subr.mxu0 0.0
    %148 = vmatpush1.msra.mxu0 0.0
    %149 = vmatprep.subr.mxu0 0.0
    %150 = vmatpush1.msra.mxu0 0.0
    %151 = vmatprep.subr.mxu0 0.0
    %152 = vmatpush1.msra.mxu0 0.0
    %153 = vmatprep.subr.mxu0 0.0
    %154 = vmatpush1.msra.mxu0 0.0
    %155 = vmatprep.subr.mxu0 0.0
    %156 = vmatpush1.msra.mxu0 %v113
    %157 = vmatprep.subr.mxu0 0.0
    %158 = vmatpush2.msra.mxu0 0.0
    %159 = vmatprep.subr.mxu0 0.0
    %160 = vmatpush2.msra.mxu0 0.0
    %161 = vmatprep.subr.mxu0 0.0
    %162 = vmatpush2.msra.mxu0 0.0
    %163 = vmatprep.subr.mxu0 0.0
    %164 = vmatpush2.msra.mxu0 0.0
    %165 = vmatprep.subr.mxu0 0.0
    %166 = vmatpush2.msra.mxu0 0.0
    %167 = vmatprep.subr.mxu0 0.0
    %168 = vmatpush2.msra.mxu0 0.0
    %169 = vmatprep.subr.mxu0 0.0
    %170 = vmatpush2.msra.mxu0 0.0
    %171 = vmatprep.subr.mxu0 0.0
    %172 = vmatpush2.msra.mxu0 0.0
    %173 = vmatprep.subr.mxu0 0.0
    %174 = vmatpush2.msra.mxu0 0.0
    %175 = vmatprep.subr.mxu0 0.0
    %176 = vmatpush2.msra.mxu0 0.0
    %177 = vmatprep.subr.mxu0 0.0
    %178 = vmatpush2.msra.mxu0 0.0
    %179 = vmatprep.subr.mxu0 0.0
    %180 = vmatpush2.msra.mxu0 0.0
    %181 = vmatprep.subr.mxu0 0.0
    %182 = vmatpush2.msra.mxu0 0.0
    %183 = vmatprep.subr.mxu0 0.0
    %184 = vmatpush2.msra.mxu0 0.0
    %185 = vmatprep.subr.mxu0 0.0
    %186 = vmatpush2.msra.mxu0 0.0
    %187 = vmatprep.subr.mxu0 0.0
    %188 = vmatpush2.msra.mxu0 0.0
    %189 = vmatprep.mubr.f32.mxu0 0.0
    %190 = vmatmul.mubr.f32.gmra.mxu0 %v123
    %v191 = vpop.f32.mrf.mxu0
    %v192 = vadd.f32 %v119, %v191
    %v193 = vpop.f32.mrf.mxu0
    %194 = vdwg.mxu0
    %v195 = vmax.f32 %v192, 0.0
    %v197 = vsel %vm121, 1.0, 0
    %199 = vmatprep.subr.mxu0 0.0
    %200 = vmatpush1.msra.mxu0 0.0
    %201 = vmatprep.subr.mxu0 0.0
    %202 = vmatpush1.msra.mxu0 0.0
    %203 = vmatprep.subr.mxu0 0.0
    %204 = vmatpush1.msra.mxu0 0.0
    %205 = vmatprep.subr.mxu0 0.0
    %206 = vmatpush1.msra.mxu0 0.0
    %207 = vmatprep.subr.mxu0 0.0
    %208 = vmatpush1.msra.mxu0 0.0
    %209 = vmatprep.subr.mxu0 0.0
    %210 = vmatpush1.msra.mxu0 0.0
    %211 = vmatprep.subr.mxu0 0.0
    %212 = vmatpush1.msra.mxu0 0.0
    %213 = vmatprep.subr.mxu0 0.0
    %214 = vmatpush1.msra.mxu0 0.0
    %215 = vmatprep.subr.mxu0 0.0
    %216 = vmatpush1.msra.mxu0 0.0
    %217 = vmatprep.subr.mxu0 0.0
    %218 = vmatpush1.msra.mxu0 0.0
    %219 = vmatprep.subr.mxu0 0.0
    %220 = vmatpush1.msra.mxu0 0.0
    %221 = vmatprep.subr.mxu0 0.0
    %222 = vmatpush1.msra.mxu0 0.0
    %223 = vmatprep.subr.mxu0 0.0
    %224 = vmatpush1.msra.mxu0 0.0
    %225 = vmatprep.subr.mxu0 0.0
    %226 = vmatpush1.msra.mxu0 0.0
    %227 = vmatprep.subr.mxu0 0.0
    %228 = vmatpush1.msra.mxu0 0.0
    %229 = vmatprep.subr.mxu0 0.0
    %230 = vmatpush1.msra.mxu0 %v195
    %231 = vmatprep.subr.mxu0 0.0
    %232 = vmatpush2.msra.mxu0 0.0
    %233 = vmatprep.subr.mxu0 0.0
    %234 = vmatpush2.msra.mxu0 0.0
    %235 = vmatprep.subr.mxu0 0.0
    %236 = vmatpush2.msra.mxu0 0.0
    %237 = vmatprep.subr.mxu0 0.0
    %238 = vmatpush2.msra.mxu0 0.0
    %239 = vmatprep.subr.mxu0 0.0
    %240 = vmatpush2.msra.mxu0 0.0
    %241 = vmatprep.subr.mxu0 0.0
    %242 = vmatpush2.msra.mxu0 0.0
    %243 = vmatprep.subr.mxu0 0.0
    %244 = vmatpush2.msra.mxu0 0.0
    %245 = vmatprep.subr.mxu0 0.0
    %246 = vmatpush2.msra.mxu0 0.0
    %247 = vmatprep.subr.mxu0 0.0
    %248 = vmatpush2.msra.mxu0 0.0
    %249 = vmatprep.subr.mxu0 0.0
    %250 = vmatpush2.msra.mxu0 0.0
    %251 = vmatprep.subr.mxu0 0.0
    %252 = vmatpush2.msra.mxu0 0.0
    %253 = vmatprep.subr.mxu0 0.0
    %254 = vmatpush2.msra.mxu0 0.0
    %255 = vmatprep.subr.mxu0 0.0
    %256 = vmatpush2.msra.mxu0 0.0
    %257 = vmatprep.subr.mxu0 0.0
    %258 = vmatpush2.msra.mxu0 0.0
    %259 = vmatprep.subr.mxu0 0.0
    %260 = vmatpush2.msra.mxu0 0.0
    %261 = vmatprep.subr.mxu0 0.0
    %262 = vmatpush2.msra.mxu0 0.0
    %263 = vmatprep.mubr.f32.mxu0 0.0
    %264 = vmatmul.mubr.f32.gmra.mxu0 %v197
    %v265 = vpop.f32.mrf.mxu0
    %v266 = vadd.f32 0.0, %v265
    %v267 = vpop.f32.mrf.mxu0
    %268 = vdwg.mxu0
    %v269 = vmul.f32 %v195, %v195
    %270 = vmatprep.subr.mxu0 0.0
    %271 = vmatpush1.msra.mxu0 0.0
    %272 = vmatprep.subr.mxu0 0.0
    %273 = vmatpush1.msra.mxu0 0.0
    %274 = vmatprep.subr.mxu0 0.0
    %275 = vmatpush1.msra.mxu0 0.0
    %276 = vmatprep.subr.mxu0 0.0
    %277 = vmatpush1.msra.mxu0 0.0
    %278 = vmatprep.subr.mxu0 0.0
    %279 = vmatpush1.msra.mxu0 0.0
    %280 = vmatprep.subr.mxu0 0.0
    %281 = vmatpush1.msra.mxu0 0.0
    %282 = vmatprep.subr.mxu0 0.0
    %283 = vmatpush1.msra.mxu0 0.0
    %284 = vmatprep.subr.mxu0 0.0
    %285 = vmatpush1.msra.mxu0 0.0
    %286 = vmatprep.subr.mxu0 0.0
    %287 = vmatpush1.msra.mxu0 0.0
    %288 = vmatprep.subr.mxu0 0.0
    %289 = vmatpush1.msra.mxu0 0.0
    %290 = vmatprep.subr.mxu0 0.0
    %291 = vmatpush1.msra.mxu0 0.0
    %292 = vmatprep.subr.mxu0 0.0
    %293 = vmatpush1.msra.mxu0 0.0
    %294 = vmatprep.subr.mxu0 0.0
    %295 = vmatpush1.msra.mxu0 0.0
    %296 = vmatprep.subr.mxu0 0.0
    %297 = vmatpush1.msra.mxu0 0.0
    %298 = vmatprep.subr.mxu0 0.0
    %299 = vmatpush1.msra.mxu0 0.0
    %300 = vmatprep.subr.mxu0 0.0
    %301 = vmatpush1.msra.mxu0 %v269
    %302 = vmatprep.subr.mxu0 0.0
    %303 = vmatpush2.msra.mxu0 0.0
    %304 = vmatprep.subr.mxu0 0.0
    %305 = vmatpush2.msra.mxu0 0.0
    %306 = vmatprep.subr.mxu0 0.0
    %307 = vmatpush2.msra.mxu0 0.0
    %308 = vmatprep.subr.mxu0 0.0
    %309 = vmatpush2.msra.mxu0 0.0
    %310 = vmatprep.subr.mxu0 0.0
    %311 = vmatpush2.msra.mxu0 0.0
    %312 = vmatprep.subr.mxu0 0.0
    %313 = vmatpush2.msra.mxu0 0.0
    %314 = vmatprep.subr.mxu0 0.0
    %315 = vmatpush2.msra.mxu0 0.0
    %316 = vmatprep.subr.mxu0 0.0
    %317 = vmatpush2.msra.mxu0 0.0
    %318 = vmatprep.subr.mxu0 0.0
    %319 = vmatpush2.msra.mxu0 0.0
    %320 = vmatprep.subr.mxu0 0.0
    %321 = vmatpush2.msra.mxu0 0.0
    %322 = vmatprep.subr.mxu0 0.0
    %323 = vmatpush2.msra.mxu0 0.0
    %324 = vmatprep.subr.mxu0 0.0
    %325 = vmatpush2.msra.mxu0 0.0
    %326 = vmatprep.subr.mxu0 0.0
    %327 = vmatpush2.msra.mxu0 0.0
    %328 = vmatprep.subr.mxu0 0.0
    %329 = vmatpush2.msra.mxu0 0.0
    %330 = vmatprep.subr.mxu0 0.0
    %331 = vmatpush2.msra.mxu0 0.0
    %332 = vmatprep.subr.mxu0 0.0
    %333 = vmatpush2.msra.mxu0 0.0
    %334 = vmatprep.mubr.f32.mxu0 0.0
    %335 = vmatmul.mubr.f32.gmra.mxu0 %v197
    %v336 = vpop.f32.mrf.mxu0
    %v337 = vadd.f32 0.0, %v336
    %v338 = vpop.f32.mrf.mxu0
    %339 = vdwg.mxu0
    %v340 = vmul.f32 %v266, 0.125
    %v341 = vmul.f32 %v337, 0.125
    %v342 = vmul.f32 %v340, %v340
    %v343 = vsub.f32 %v341, %v342
    %v344 = vadd.f32 %v343, 1e-05
    %v345 = vrsqrt.pop %v344
    %v346 = vmul.f32 %v345, %v112
    %v347 = vmul.f32 %v340, %v346
    %v349 = vrot.slane %v347, 7
    %v351 = vsub.f32 %v112, %v349
    %v352 = vlaneseq
    %v353 = vshrl.u32 %v352, 7
    %v354 = vsub.s32 0, %v353
    %v355 = vrot.slane %v346, %v354
    %v356 = vmul.f32 %v195, %v355
    %v357 = vlaneseq
    %v358 = vshrl.u32 %v357, 7
    %v359 = vsub.s32 1, %v358
    %v360 = vrot.slane %v351, %v359
    %v361 = vadd.f32 %v356, %v360
    %v362 = vld [vmem:[#allocation9] sm:$0xff]
    %v363 = vld [vmem:[#allocation9 + $0x8] sm:$0xff]
    %v364 = vld [vmem:[#allocation9 + $0x10] sm:$0xff]
    %v365 = vld [vmem:[#allocation9 + $0x18] sm:$0xff]
    %v366 = vld [vmem:[#allocation9 + $0x20] sm:$0xff]
    %v367 = vld [vmem:[#allocation9 + $0x28] sm:$0xff]
    %v368 = vld [vmem:[#allocation9 + $0x30] sm:$0xff]
    %v369 = vld [vmem:[#allocation9 + $0x38] sm:$0xff]
    %v370 = vld [vmem:[#allocation9 + $0x40] sm:$0xff]
    %v371 = vld [vmem:[#allocation9 + $0x48] sm:$0xff]
    %v372 = vld [vmem:[#allocation9 + $0x50] sm:$0xff]
    %v373 = vld [vmem:[#allocation9 + $0x58] sm:$0xff]
    %v374 = vld [vmem:[#allocation9 + $0x60] sm:$0xff]
    %v375 = vld [vmem:[#allocation9 + $0x68] sm:$0xff]
    %v376 = vld [vmem:[#allocation9 + $0x70] sm:$0xff]
    %v377 = vld [vmem:[#allocation9 + $0x78] sm:$0xff]
    %v378 = vld [vmem:[%s5] sm:$0x1]
    %v380 = vlaneseq
    %v381 = vshrl.u32 %v380, 7
    %v382 = vsub.s32 0, %v381
    %v383 = vrot.slane %v378, %v382
    %385 = vmatprep.subr.mxu0 0.0
    %386 = vmatpush1.msra.mxu0 %v377
    %387 = vmatprep.subr.mxu0 0.0
    %388 = vmatpush1.msra.mxu0 %v376
    %389 = vmatprep.subr.mxu0 0.0
    %390 = vmatpush1.msra.mxu0 %v375
    %391 = vmatprep.subr.mxu0 0.0
    %392 = vmatpush1.msra.mxu0 %v374
    %393 = vmatprep.subr.mxu0 0.0
    %394 = vmatpush1.msra.mxu0 %v373
    %395 = vmatprep.subr.mxu0 0.0
    %396 = vmatpush1.msra.mxu0 %v372
    %397 = vmatprep.subr.mxu0 0.0
    %398 = vmatpush1.msra.mxu0 %v371
    %399 = vmatprep.subr.mxu0 0.0
    %400 = vmatpush1.msra.mxu0 %v370
    %401 = vmatprep.subr.mxu0 0.0
    %402 = vmatpush1.msra.mxu0 %v369
    %403 = vmatprep.subr.mxu0 0.0
    %404 = vmatpush1.msra.mxu0 %v368
    %405 = vmatprep.subr.mxu0 0.0
    %406 = vmatpush1.msra.mxu0 %v367
    %407 = vmatprep.subr.mxu0 0.0
    %408 = vmatpush1.msra.mxu0 %v366
    %409 = vmatprep.subr.mxu0 0.0
    %410 = vmatpush1.msra.mxu0 %v365
    %411 = vmatprep.subr.mxu0 0.0
    %412 = vmatpush1.msra.mxu0 %v364
    %413 = vmatprep.subr.mxu0 0.0
    %414 = vmatpush1.msra.mxu0 %v363
    %415 = vmatprep.subr.mxu0 0.0
    %416 = vmatpush1.msra.mxu0 %v362
    %417 = vmatprep.subr.mxu0 0.0
    %418 = vmatpush2.msra.mxu0 0.0
    %419 = vmatprep.subr.mxu0 0.0
    %420 = vmatpush2.msra.mxu0 0.0
    %421 = vmatprep.subr.mxu0 0.0
    %422 = vmatpush2.msra.mxu0 0.0
    %423 = vmatprep.subr.mxu0 0.0
    %424 = vmatpush2.msra.mxu0 0.0
    %425 = vmatprep.subr.mxu0 0.0
    %426 = vmatpush2.msra.mxu0 0.0
    %427 = vmatprep.subr.mxu0 0.0
    %428 = vmatpush2.msra.mxu0 0.0
    %429 = vmatprep.subr.mxu0 0.0
    %430 = vmatpush2.msra.mxu0 0.0
    %431 = vmatprep.subr.mxu0 0.0
    %432 = vmatpush2.msra.mxu0 0.0
    %433 = vmatprep.subr.mxu0 0.0
    %434 = vmatpush2.msra.mxu0 0.0
    %435 = vmatprep.subr.mxu0 0.0
    %436 = vmatpush2.msra.mxu0 0.0
    %437 = vmatprep.subr.mxu0 0.0
    %438 = vmatpush2.msra.mxu0 0.0
    %439 = vmatprep.subr.mxu0 0.0
    %440 = vmatpush2.msra.mxu0 0.0
    %441 = vmatprep.subr.mxu0 0.0
    %442 = vmatpush2.msra.mxu0 0.0
    %443 = vmatprep.subr.mxu0 0.0
    %444 = vmatpush2.msra.mxu0 0.0
    %445 = vmatprep.subr.mxu0 0.0
    %446 = vmatpush2.msra.mxu0 0.0
    %447 = vmatprep.subr.mxu0 0.0
    %448 = vmatpush2.msra.mxu0 0.0
    %449 = vmatprep.mubr.f32.mxu0 0.0
    %450 = vmatmul.mubr.f32.gmra.mxu0 %v361
    %v451 = vpop.f32.mrf.mxu0
    %v452 = vadd.f32 %v383, %v451
    %v453 = vpop.f32.mrf.mxu0
    %454 = vdwg.mxu0
    %v455 = vmax.f32 %v452, 0.0
    %456 = vmatprep.subr.mxu0 0.0
    %457 = vmatpush1.msra.mxu0 0.0
    %458 = vmatprep.subr.mxu0 0.0
    %459 = vmatpush1.msra.mxu0 0.0
    %460 = vmatprep.subr.mxu0 0.0
    %461 = vmatpush1.msra.mxu0 0.0
    %462 = vmatprep.subr.mxu0 0.0
    %463 = vmatpush1.msra.mxu0 0.0
    %464 = vmatprep.subr.mxu0 0.0
    %465 = vmatpush1.msra.mxu0 0.0
    %466 = vmatprep.subr.mxu0 0.0
    %467 = vmatpush1.msra.mxu0 0.0
    %468 = vmatprep.subr.mxu0 0.0
    %469 = vmatpush1.msra.mxu0 0.0
    %470 = vmatprep.subr.mxu0 0.0
    %471 = vmatpush1.msra.mxu0 0.0
    %472 = vmatprep.subr.mxu0 0.0
    %473 = vmatpush1.msra.mxu0 0.0
    %474 = vmatprep.subr.mxu0 0.0
    %475 = vmatpush1.msra.mxu0 0.0
    %476 = vmatprep.subr.mxu0 0.0
    %477 = vmatpush1.msra.mxu0 0.0
    %478 = vmatprep.subr.mxu0 0.0
    %479 = vmatpush1.msra.mxu0 0.0
    %480 = vmatprep.subr.mxu0 0.0
    %481 = vmatpush1.msra.mxu0 0.0
    %482 = vmatprep.subr.mxu0 0.0
    %483 = vmatpush1.msra.mxu0 0.0
    %484 = vmatprep.subr.mxu0 0.0
    %485 = vmatpush1.msra.mxu0 0.0
    %486 = vmatprep.subr.mxu0 0.0
    %487 = vmatpush1.msra.mxu0 %v455
    %488 = vmatprep.subr.mxu0 0.0
    %489 = vmatpush2.msra.mxu0 0.0
    %490 = vmatprep.subr.mxu0 0.0
    %491 = vmatpush2.msra.mxu0 0.0
    %492 = vmatprep.subr.mxu0 0.0
    %493 = vmatpush2.msra.mxu0 0.0
    %494 = vmatprep.subr.mxu0 0.0
    %495 = vmatpush2.msra.mxu0 0.0
    %496 = vmatprep.subr.mxu0 0.0
    %497 = vmatpush2.msra.mxu0 0.0
    %498 = vmatprep.subr.mxu0 0.0
    %499 = vmatpush2.msra.mxu0 0.0
    %500 = vmatprep.subr.mxu0 0.0
    %501 = vmatpush2.msra.mxu0 0.0
    %502 = vmatprep.subr.mxu0 0.0
    %503 = vmatpush2.msra.mxu0 0.0
    %504 = vmatprep.subr.mxu0 0.0
    %505 = vmatpush2.msra.mxu0 0.0
    %506 = vmatprep.subr.mxu0 0.0
    %507 = vmatpush2.msra.mxu0 0.0
    %508 = vmatprep.subr.mxu0 0.0
    %509 = vmatpush2.msra.mxu0 0.0
    %510 = vmatprep.subr.mxu0 0.0
    %511 = vmatpush2.msra.mxu0 0.0
    %512 = vmatprep.subr.mxu0 0.0
    %513 = vmatpush2.msra.mxu0 0.0
    %514 = vmatprep.subr.mxu0 0.0
    %515 = vmatpush2.msra.mxu0 0.0
    %516 = vmatprep.subr.mxu0 0.0
    %517 = vmatpush2.msra.mxu0 0.0
    %518 = vmatprep.subr.mxu0 0.0
    %519 = vmatpush2.msra.mxu0 0.0
    %520 = vmatprep.mubr.f32.mxu0 0.0
    %521 = vmatmul.mubr.f32.gmra.mxu0 %v197
    %v522 = vpop.f32.mrf.mxu0
    %v523 = vadd.f32 0.0, %v522
    %v524 = vpop.f32.mrf.mxu0
    %525 = vdwg.mxu0
    %v526 = vmul.f32 %v455, %v455
    %527 = vmatprep.subr.mxu0 0.0
    %528 = vmatpush1.msra.mxu0 0.0
    %529 = vmatprep.subr.mxu0 0.0
    %530 = vmatpush1.msra.mxu0 0.0
    %531 = vmatprep.subr.mxu0 0.0
    %532 = vmatpush1.msra.mxu0 0.0
    %533 = vmatprep.subr.mxu0 0.0
    %534 = vmatpush1.msra.mxu0 0.0
    %535 = vmatprep.subr.mxu0 0.0
    %536 = vmatpush1.msra.mxu0 0.0
    %537 = vmatprep.subr.mxu0 0.0
    %538 = vmatpush1.msra.mxu0 0.0
    %539 = vmatprep.subr.mxu0 0.0
    %540 = vmatpush1.msra.mxu0 0.0
    %541 = vmatprep.subr.mxu0 0.0
    %542 = vmatpush1.msra.mxu0 0.0
    %543 = vmatprep.subr.mxu0 0.0
    %544 = vmatpush1.msra.mxu0 0.0
    %545 = vmatprep.subr.mxu0 0.0
    %546 = vmatpush1.msra.mxu0 0.0
    %547 = vmatprep.subr.mxu0 0.0
    %548 = vmatpush1.msra.mxu0 0.0
    %549 = vmatprep.subr.mxu0 0.0
    %550 = vmatpush1.msra.mxu0 0.0
    %551 = vmatprep.subr.mxu0 0.0
    %552 = vmatpush1.msra.mxu0 0.0
    %553 = vmatprep.subr.mxu0 0.0
    %554 = vmatpush1.msra.mxu0 0.0
    %555 = vmatprep.subr.mxu0 0.0
    %556 = vmatpush1.msra.mxu0 0.0
    %557 = vmatprep.subr.mxu0 0.0
    %558 = vmatpush1.msra.mxu0 %v526
    %559 = vmatprep.subr.mxu0 0.0
    %560 = vmatpush2.msra.mxu0 0.0
    %561 = vmatprep.subr.mxu0 0.0
    %562 = vmatpush2.msra.mxu0 0.0
    %563 = vmatprep.subr.mxu0 0.0
    %564 = vmatpush2.msra.mxu0 0.0
    %565 = vmatprep.subr.mxu0 0.0
    %566 = vmatpush2.msra.mxu0 0.0
    %567 = vmatprep.subr.mxu0 0.0
    %568 = vmatpush2.msra.mxu0 0.0
    %569 = vmatprep.subr.mxu0 0.0
    %570 = vmatpush2.msra.mxu0 0.0
    %571 = vmatprep.subr.mxu0 0.0
    %572 = vmatpush2.msra.mxu0 0.0
    %573 = vmatprep.subr.mxu0 0.0
    %574 = vmatpush2.msra.mxu0 0.0
    %575 = vmatprep.subr.mxu0 0.0
    %576 = vmatpush2.msra.mxu0 0.0
    %577 = vmatprep.subr.mxu0 0.0
    %578 = vmatpush2.msra.mxu0 0.0
    %579 = vmatprep.subr.mxu0 0.0
    %580 = vmatpush2.msra.mxu0 0.0
    %581 = vmatprep.subr.mxu0 0.0
    %582 = vmatpush2.msra.mxu0 0.0
    %583 = vmatprep.subr.mxu0 0.0
    %584 = vmatpush2.msra.mxu0 0.0
    %585 = vmatprep.subr.mxu0 0.0
    %586 = vmatpush2.msra.mxu0 0.0
    %587 = vmatprep.subr.mxu0 0.0
    %588 = vmatpush2.msra.mxu0 0.0
    %589 = vmatprep.subr.mxu0 0.0
    %590 = vmatpush2.msra.mxu0 0.0
    %591 = vmatprep.mubr.f32.mxu0 0.0
    %592 = vmatmul.mubr.f32.gmra.mxu0 %v197
    %v593 = vpop.f32.mrf.mxu0
    %v594 = vadd.f32 0.0, %v593
    %v595 = vpop.f32.mrf.mxu0
    %596 = vdwg.mxu0
    %v597 = vmul.f32 %v523, 0.125
    %v598 = vmul.f32 %v594, 0.125
    %v599 = vmul.f32 %v597, %v597
    %v600 = vsub.f32 %v598, %v599
    %v601 = vadd.f32 %v600, 1e-05
    %v602 = vrsqrt.pop %v601
    %v604 = vrot.slane %v112, 2
    %v606 = vmul.f32 %v602, %v604
    %v607 = vmul.f32 %v597, %v606
    %v609 = vrot.slane %v607, 5
    %v611 = vsub.f32 %v112, %v609
    %v612 = vlaneseq
    %v613 = vshrl.u32 %v612, 7
    %v614 = vsub.s32 0, %v613
    %v615 = vrot.slane %v606, %v614
    %v616 = vmul.f32 %v455, %v615
    %v617 = vlaneseq
    %v618 = vshrl.u32 %v617, 7
    %v619 = vsub.s32 3, %v618
    %v620 = vrot.slane %v611, %v619
    %v621 = vadd.f32 %v616, %v620
    %v622 = vld [vmem:[#allocation10] sm:$0xff]
    %v623 = vld [vmem:[#allocation10 + $0x8] sm:$0xff]
    %v624 = vld [vmem:[#allocation10 + $0x10] sm:$0xff]
    %v625 = vld [vmem:[#allocation10 + $0x18] sm:$0xff]
    %v626 = vld [vmem:[#allocation10 + $0x20] sm:$0xff]
    %v627 = vld [vmem:[#allocation10 + $0x28] sm:$0xff]
    %v628 = vld [vmem:[#allocation10 + $0x30] sm:$0xff]
    %v629 = vld [vmem:[#allocation10 + $0x38] sm:$0xff]
    %v630 = vld [vmem:[#allocation10 + $0x40] sm:$0xff]
    %v631 = vld [vmem:[#allocation10 + $0x48] sm:$0xff]
    %v632 = vld [vmem:[#allocation10 + $0x50] sm:$0xff]
    %v633 = vld [vmem:[#allocation10 + $0x58] sm:$0xff]
    %v634 = vld [vmem:[#allocation10 + $0x60] sm:$0xff]
    %v635 = vld [vmem:[#allocation10 + $0x68] sm:$0xff]
    %v636 = vld [vmem:[#allocation10 + $0x70] sm:$0xff]
    %v637 = vld [vmem:[#allocation10 + $0x78] sm:$0xff]
    %v638 = vld [vmem:[#allocation12] sm:$0x1]
    %v640 = vlaneseq
    %v641 = vshrl.u32 %v640, 7
    %v642 = vsub.s32 0, %v641
    %v643 = vrot.slane %v638, %v642
    %645 = vmatprep.subr.mxu0 0.0
    %646 = vmatpush1.msra.mxu0 %v637
    %647 = vmatprep.subr.mxu0 0.0
    %648 = vmatpush1.msra.mxu0 %v636
    %649 = vmatprep.subr.mxu0 0.0
    %650 = vmatpush1.msra.mxu0 %v635
    %651 = vmatprep.subr.mxu0 0.0
    %652 = vmatpush1.msra.mxu0 %v634
    %653 = vmatprep.subr.mxu0 0.0
    %654 = vmatpush1.msra.mxu0 %v633
    %655 = vmatprep.subr.mxu0 0.0
    %656 = vmatpush1.msra.mxu0 %v632
    %657 = vmatprep.subr.mxu0 0.0
    %658 = vmatpush1.msra.mxu0 %v631
    %659 = vmatprep.subr.mxu0 0.0
    %660 = vmatpush1.msra.mxu0 %v630
    %661 = vmatprep.subr.mxu0 0.0
    %662 = vmatpush1.msra.mxu0 %v629
    %663 = vmatprep.subr.mxu0 0.0
    %664 = vmatpush1.msra.mxu0 %v628
    %665 = vmatprep.subr.mxu0 0.0
    %666 = vmatpush1.msra.mxu0 %v627
    %667 = vmatprep.subr.mxu0 0.0
    %668 = vmatpush1.msra.mxu0 %v626
    %669 = vmatprep.subr.mxu0 0.0
    %670 = vmatpush1.msra.mxu0 %v625
    %671 = vmatprep.subr.mxu0 0.0
    %672 = vmatpush1.msra.mxu0 %v624
    %673 = vmatprep.subr.mxu0 0.0
    %674 = vmatpush1.msra.mxu0 %v623
    %675 = vmatprep.subr.mxu0 0.0
    %676 = vmatpush1.msra.mxu0 %v622
    %677 = vmatprep.subr.mxu0 0.0
    %678 = vmatpush2.msra.mxu0 0.0
    %679 = vmatprep.subr.mxu0 0.0
    %680 = vmatpush2.msra.mxu0 0.0
    %681 = vmatprep.subr.mxu0 0.0
    %682 = vmatpush2.msra.mxu0 0.0
    %683 = vmatprep.subr.mxu0 0.0
    %684 = vmatpush2.msra.mxu0 0.0
    %685 = vmatprep.subr.mxu0 0.0
    %686 = vmatpush2.msra.mxu0 0.0
    %687 = vmatprep.subr.mxu0 0.0
    %688 = vmatpush2.msra.mxu0 0.0
    %689 = vmatprep.subr.mxu0 0.0
    %690 = vmatpush2.msra.mxu0 0.0
    %691 = vmatprep.subr.mxu0 0.0
    %692 = vmatpush2.msra.mxu0 0.0
    %693 = vmatprep.subr.mxu0 0.0
    %694 = vmatpush2.msra.mxu0 0.0
    %695 = vmatprep.subr.mxu0 0.0
    %696 = vmatpush2.msra.mxu0 0.0
    %697 = vmatprep.subr.mxu0 0.0
    %698 = vmatpush2.msra.mxu0 0.0
    %699 = vmatprep.subr.mxu0 0.0
    %700 = vmatpush2.msra.mxu0 0.0
    %701 = vmatprep.subr.mxu0 0.0
    %702 = vmatpush2.msra.mxu0 0.0
    %703 = vmatprep.subr.mxu0 0.0
    %704 = vmatpush2.msra.mxu0 0.0
    %705 = vmatprep.subr.mxu0 0.0
    %706 = vmatpush2.msra.mxu0 0.0
    %707 = vmatprep.subr.mxu0 0.0
    %708 = vmatpush2.msra.mxu0 0.0
    %709 = vmatprep.mubr.f32.mxu0 0.0
    %710 = vmatmul.mubr.f32.gmra.mxu0 %v621
    %v711 = vpop.f32.mrf.mxu0
    %v712 = vadd.f32 %v643, %v711
    %v713 = vpop.f32.mrf.mxu0
    %714 = vdwg.mxu0
    %715 = vst [vmem:[#allocation13] sm:$0xff] %v712
    // Predicated region
    $region54: #{tpu_custom_call.1} parent=1 // pred_check
      _
    $region55: #{tpu_custom_call.1} parent=1 // pred_check_branch
      %717 = sbr.rel (0) target = $region57
    $region56: #{tpu_custom_call.1} parent=1 // pred_region
      %s719 = ssub.s32 128, 128
      %720 = vsyncadd [#allocation6], %s719
      %s722 = sshll.u32 [#allocation13], 4
      %s723 = int_to_ptr.vmem [resolvable:$true] %s722
      %725 = dma.vmem_to_hbm [thread:$0]  %s723, 128, %s9, [#allocation6]
    $region57: #{tpu_custom_call.1} parent=1 // pred_fallthru
      _
    // Predicated region
    $region58: #{tpu_custom_call.1} parent=1 // pred_check
      _
    $region59: #{tpu_custom_call.1} parent=1 // pred_check_branch
      %727 = sbr.rel (0) target = $region61
    $region60: #{tpu_custom_call.1} parent=1 // pred_region
      %728 = dma.done [#allocation6], 128
    $region61: #{tpu_custom_call.1} parent=1 // pred_fallthru
      _
    %729 = vsyncpa [#allocation5], 1
    %730 = vsyncpa [#allocation8], 1
    %731 = vsyncpa [#allocation11], 1
    %732 = vsyncpa [#allocation6], 1

</llo_original>
